<compile_context>
chip_gen: v5e
topology: v5e:2x2
jax: 0.10.0
libtpu: 0.0.40
codegen_flags: <defaults>
</compile_context>

<pallas_src>
import functools

import jax
import jax.numpy as jnp
import numpy as np
from jax.experimental import pallas as pl
from jax.experimental.pallas import tpu as pltpu


def drew_gatedgcn_kernel(K, Dout, alpha,
                         x_ref, gi_ref, gj_ref, mask_ref,
                         w_all_ref, b_all_ref, gamma_ref, beta_ref,
                         out_ref, h_all_ref, acc_ref):
    f32 = jnp.float32
    e = pl.program_id(0)

    # ---- step 0: fused node linears (A | D | B_0..B_{K-1} | E_0..E_{K-1})
    # and accumulator init --------------------------------------------------
    @pl.when(e == 0)
    def _():
        h_all_ref[...] = (
            jnp.dot(x_ref[...], w_all_ref[...], preferred_element_type=f32)
            + b_all_ref[...])
        acc_ref[...] = jnp.zeros_like(acc_ref)

    h_all = h_all_ref[...]                       # [N, (2+2K)*Dout]
    Dx = h_all[:, Dout:2 * Dout]                 # [N, Dout]
    BE = h_all[:, 2 * Dout:]                     # [N, 2K*Dout]  (B blocks | E blocks)

    # bf16 one-hots / mask are exact 0/1; cast to f32 so all math stays f32.
    gi = gi_ref[...].astype(f32)                 # [tE, N]  dest one-hot
    gj = gj_ref[...].astype(f32)                 # [tE, N]  src  one-hot
    mask = mask_ref[...].astype(f32)             # [tE, K*Dout]

    # Fused edge gathers (2 matmuls total instead of 1 + 2K narrow ones).
    Dx_i = jnp.dot(gi, Dx, preferred_element_type=f32)      # [tE, Dout]
    BE_j = jnp.dot(gj, BE, preferred_element_type=f32)      # [tE, 2K*Dout]
    B_j = BE_j[:, :K * Dout]                                 # [tE, K*Dout]
    E_j = BE_j[:, K * Dout:]                                 # [tE, K*Dout]

    # Gate for all k at once; masked edges contribute exactly 0 to num & den.
    Dx_i_t = jnp.concatenate([Dx_i] * K, axis=1)             # [tE, K*Dout]
    sigma = jax.nn.sigmoid(Dx_i_t + E_j) * mask              # [tE, K*Dout]

    # Fused scatter-add for all k (num | den) as ONE transposed contraction
    # on gi (no explicit gi^T input, no XLU transpose).
    scat_rhs = jnp.concatenate([sigma * B_j, sigma], axis=1)  # [tE, 2K*Dout]
    acc_ref[...] += jax.lax.dot_general(
        gi, scat_rhs,
        dimension_numbers=(((0,), (0,)), ((), ())),
        preferred_element_type=f32)                           # [N, 2K*Dout]

    # ---- last step: eta, combine, BatchNorm (training), ReLU ---------------
    @pl.when(e == pl.num_programs(0) - 1)
    def _():
        acc = acc_ref[...]
        num_all = acc[:, :K * Dout]
        den_all = acc[:, K * Dout:]
        eta_all = num_all * pl.reciprocal(den_all + 1e-6, approx=False)

        agg = eta_all[:, :Dout]
        for k in range(1, K):                     # K is small & static
            agg = agg + eta_all[:, k * Dout:(k + 1) * Dout]

        Ax = h_all[:, :Dout]
        h = Ax + alpha * agg                      # alpha = 1/K (compile-time)

        # BatchNorm1d, training mode, single pass (sum / sum-of-squares).
        n = h.shape[0]
        mean = jnp.sum(h, axis=0, keepdims=True) * (1.0 / n)
        meansq = jnp.sum(h * h, axis=0, keepdims=True) * (1.0 / n)
        var = meansq - mean * mean
        hn = (h - mean) * jax.lax.rsqrt(var + 1e-5) * gamma_ref[...] + beta_ref[...]
        out_ref[...] = jnp.maximum(hn, 0.0)
        # TODO(synk): dropout (p=0.0) and residual (False) are no-ops here.


def drew_gatedgcn_forward(x, edge_index, edge_attr, params, k_list,
                          edge_tile=32):
    N, Din = x.shape
    K = len(k_list)
    Dout = params["W_A"].shape[1]
    E = edge_index.shape[1]

    j_idx = edge_index[0]   # source
    i_idx = edge_index[1]   # destination

    # One-hot gather matrices and per-k edge masks, stored in bf16 (exact 0/1).
    gi = jax.nn.one_hot(i_idx, N, dtype=jnp.bfloat16)               # [E, N]
    gj = jax.nn.one_hot(j_idx, N, dtype=jnp.bfloat16)               # [E, N]
    mask = jnp.stack([(edge_attr == k) for k in k_list], axis=1)    # [E, K]
    mask = jnp.repeat(mask.astype(jnp.bfloat16), Dout, axis=1)      # [E, K*Dout]

    # Pad the edge dimension to a multiple of the tile (padded edges masked out).
    E_pad = edge_tile * (-(-E // edge_tile))
    pad = E_pad - E
    if pad:
        gi = jnp.pad(gi, ((0, pad), (0, 0)))
        gj = jnp.pad(gj, ((0, pad), (0, 0)))
        mask = jnp.pad(mask, ((0, pad), (0, 0)))
    num_tiles = E_pad // edge_tile

    # Fuse all node-level linears: [W_A | W_D | W_B_0.. | W_E_0..].
    w_all = jnp.concatenate(
        [params["W_A"], params["W_D"]]
        + [params["W_B"][k] for k in range(K)]
        + [params["W_E"][k] for k in range(K)], axis=1)              # [Din,(2+2K)*Dout]
    b_all = jnp.concatenate(
        [params["b_A"], params["b_D"]]
        + [params["b_B"][k] for k in range(K)]
        + [params["b_E"][k] for k in range(K)], axis=1)              # [1,(2+2K)*Dout]

    # alpha = softmax(ones(K)); convex_combo=True -> no rescaling. Compile-time.
    alpha = float(jax.nn.softmax(jnp.ones((K,), jnp.float32))[0])

    Dfull = (2 + 2 * K) * Dout

    kernel = functools.partial(drew_gatedgcn_kernel, K, Dout, alpha)
    out = pl.pallas_call(
        kernel,
        out_shape=jax.ShapeDtypeStruct((N, Dout), jnp.float32),
        grid_spec=pltpu.PrefetchScalarGridSpec(
            num_scalar_prefetch=0,
            grid=(num_tiles,),
            in_specs=[
                pl.BlockSpec((N, Din), lambda e: (0, 0)),            # x
                pl.BlockSpec((edge_tile, N), lambda e: (e, 0)),      # gi tile
                pl.BlockSpec((edge_tile, N), lambda e: (e, 0)),      # gj tile
                pl.BlockSpec((edge_tile, K * Dout), lambda e: (e, 0)),  # mask tile
                pl.BlockSpec((Din, Dfull), lambda e: (0, 0)),        # W_all
                pl.BlockSpec((1, Dfull), lambda e: (0, 0)),          # b_all
                pl.BlockSpec((1, Dout), lambda e: (0, 0)),           # gamma
                pl.BlockSpec((1, Dout), lambda e: (0, 0)),           # beta
            ],
            out_specs=pl.BlockSpec((N, Dout), lambda e: (0, 0)),
            scratch_shapes=[
                pltpu.VMEM((N, Dfull), jnp.float32),        # fused node-linear result
                pltpu.VMEM((N, 2 * K * Dout), jnp.float32), # num|den accumulator
            ]),
        compiler_params=pltpu.CompilerParams(
            dimension_semantics=("arbitrary",)),
    )(x, gi, gj, mask, w_all, b_all, params["gamma"], params["beta"])
    return out


def reference_forward(x, edge_index, edge_attr, params, k_list):
    """Plain-JAX mirror of the PyTorch forward (for correctness checking)."""
    N = x.shape[0]
    j_idx = edge_index[0]
    i_idx = edge_index[1]
    K = len(k_list)
    alpha = jax.nn.softmax(jnp.ones((K,), jnp.float32))

    Ax = x @ params["W_A"] + params["b_A"]
    Dx = x @ params["W_D"] + params["b_D"]
    agg = jnp.zeros_like(Ax)
    for ki, k in enumerate(k_list):
        m = (edge_attr == k).astype(x.dtype)[:, None]
        Bxk = x @ params["W_B"][ki] + params["b_B"][ki]
        Exk = x @ params["W_E"][ki] + params["b_E"][ki]
        Dx_i = Dx[i_idx]
        Ex_j = Exk[j_idx]
        Bx_j = Bxk[j_idx]
        sigma = jax.nn.sigmoid(Dx_i + Ex_j) * m
        num = jax.ops.segment_sum(sigma * Bx_j, i_idx, num_segments=N)
        den = jax.ops.segment_sum(sigma, i_idx, num_segments=N)
        agg = agg + alpha[ki] * (num / (den + 1e-6))
    h = Ax + agg
    mean = h.mean(0, keepdims=True)
    var = ((h - mean) ** 2).mean(0, keepdims=True)
    h = (h - mean) / jnp.sqrt(var + 1e-5) * params["gamma"] + params["beta"]
    return jnp.maximum(h, 0.0)


if __name__ == "__main__":
    key = jax.random.PRNGKey(0)
    N, Din, Dout = 16, 32, 32
    t = 1
    k_list = [1, 2]          # get_k_neighbourhoods(t) for t=1
    K = len(k_list)

    # Deterministic graph: ring with 1-hop edges (k=1) and 2-hop edges (k=2),
    # both directions.  edge_index[0] = source j, edge_index[1] = dest i.
    src = np.arange(N)
    e1 = np.stack([np.concatenate([src, (src + 1) % N]),
                   np.concatenate([(src + 1) % N, src])])
    e2 = np.stack([np.concatenate([src, (src + 2) % N]),
                   np.concatenate([(src + 2) % N, src])])
    edge_index = jnp.asarray(np.concatenate([e1, e2], axis=1), dtype=jnp.int32)  # [2, 64]
    edge_attr = jnp.asarray(np.concatenate([np.full(2 * N, 1), np.full(2 * N, 2)]),
                            dtype=jnp.int32)                                      # [64]

    # Deterministic parameter init.
    keys = jax.random.split(key, 10)
    params = {
        "W_A": 0.1 * jax.random.normal(keys[0], (Din, Dout), jnp.float32),
        "b_A": 0.1 * jax.random.normal(keys[1], (1, Dout), jnp.float32),
        "W_D": 0.1 * jax.random.normal(keys[2], (Din, Dout), jnp.float32),
        "b_D": 0.1 * jax.random.normal(keys[3], (1, Dout), jnp.float32),
        "W_B": 0.1 * jax.random.normal(keys[4], (K, Din, Dout), jnp.float32),
        "b_B": 0.1 * jax.random.normal(keys[5], (K, 1, Dout), jnp.float32),
        "W_E": 0.1 * jax.random.normal(keys[6], (K, Din, Dout), jnp.float32),
        "b_E": 0.1 * jax.random.normal(keys[7], (K, 1, Dout), jnp.float32),
        "gamma": jnp.ones((1, Dout), jnp.float32),   # BatchNorm1d default init
        "beta": jnp.zeros((1, Dout), jnp.float32),
    }

    x = jax.random.normal(keys[8], (N, Din), jnp.float32)

    out = drew_gatedgcn_forward(x, edge_index, edge_attr, params, k_list,
                                edge_tile=32)
    out = jax.block_until_ready(out)

    ref = reference_forward(x, edge_index, edge_attr, params, k_list)
    if not np.allclose(np.asarray(out), np.asarray(ref), rtol=1e-4, atol=1e-4):
        raise AssertionError("Pallas kernel output does not match reference")

    print("KERNEL_OK")
</pallas_src>

<mosaic_0001>
module attributes {stable_mosaic.version = 11 : i64} {
  func.func @drew_gatedgcn_kernel(%arg0: i32, %arg1: memref<16x32xf32, #tpu.memory_space<vmem>>, %arg2: memref<32x16xbf16, #tpu.memory_space<vmem>>, %arg3: memref<32x16xbf16, #tpu.memory_space<vmem>>, %arg4: memref<32x64xbf16, #tpu.memory_space<vmem>>, %arg5: memref<32x192xf32, #tpu.memory_space<vmem>>, %arg6: memref<1x192xf32, #tpu.memory_space<vmem>>, %arg7: memref<1x32xf32, #tpu.memory_space<vmem>>, %arg8: memref<1x32xf32, #tpu.memory_space<vmem>>, %arg9: memref<16x32xf32, #tpu.memory_space<vmem>>, %arg10: memref<16x192xf32, #tpu.memory_space<vmem>>, %arg11: memref<16x128xf32, #tpu.memory_space<vmem>>) attributes {dimension_semantics = [#tpu.dimension_semantics<arbitrary>], iteration_bounds = array<i64: 2>, scalar_prefetch = 0 : i64, scratch_operands = 2 : i64, tpu.core_type = #tpu.core_type<tc>, window_params = [{pipeline_mode = #tpu.pipeline_mode<synchronous>, transform_indices = @transform_0, window_bounds = array<i64: 16, 32>}, {transform_indices = @transform_1, window_bounds = array<i64: 32, 16>}, {transform_indices = @transform_2, window_bounds = array<i64: 32, 16>}, {transform_indices = @transform_3, window_bounds = array<i64: 32, 64>}, {pipeline_mode = #tpu.pipeline_mode<synchronous>, transform_indices = @transform_4, window_bounds = array<i64: 32, 192>}, {pipeline_mode = #tpu.pipeline_mode<synchronous>, transform_indices = @transform_5, window_bounds = array<i64: 1, 192>}, {pipeline_mode = #tpu.pipeline_mode<synchronous>, transform_indices = @transform_6, window_bounds = array<i64: 1, 32>}, {pipeline_mode = #tpu.pipeline_mode<synchronous>, transform_indices = @transform_7, window_bounds = array<i64: 1, 32>}, {pipeline_mode = #tpu.pipeline_mode<synchronous>, transform_indices = @transform_8, window_bounds = array<i64: 16, 32>}]} {
    %c0_i32 = arith.constant 0 : i32
    %0 = arith.cmpi eq, %arg0, %c0_i32 : i32
    %1 = arith.extui %0 : i1 to i32
    %c0_i32_0 = arith.constant 0 : i32
    %2 = arith.cmpi ne, %1, %c0_i32_0 : i32
    scf.if %2 {
      %c0_16 = arith.constant 0 : index
      %c0_17 = arith.constant 0 : index
      %33 = vector.load %arg1[%c0_16, %c0_17] : memref<16x32xf32, #tpu.memory_space<vmem>>, vector<16x32xf32>
      %c0_18 = arith.constant 0 : index
      %c0_19 = arith.constant 0 : index
      %34 = vector.load %arg5[%c0_18, %c0_19] : memref<32x192xf32, #tpu.memory_space<vmem>>, vector<32x192xf32>
      %cst_20 = arith.constant dense<0.000000e+00> : vector<16x192xf32>
      %35 = tpu.matmul %33, %34, %cst_20 {dimension_numbers = #tpu.dot_dimension_numbers<[1], [0], [0], [1], [0, 0, 1, 1], [], []>} : vector<16x32xf32>, vector<32x192xf32>, vector<16x192xf32> -> vector<16x192xf32>
      %c0_21 = arith.constant 0 : index
      %c0_22 = arith.constant 0 : index
      %36 = vector.load %arg6[%c0_21, %c0_22] : memref<1x192xf32, #tpu.memory_space<vmem>>, vector<1x192xf32>
      %37 = vector.broadcast %36 : vector<1x192xf32> to vector<16x192xf32>
      %38 = arith.addf %35, %37 : vector<16x192xf32>
      %c0_23 = arith.constant 0 : index
      %c0_24 = arith.constant 0 : index
      %39 = vector.load %arg10[%c0_23, %c0_24] : memref<16x192xf32, #tpu.memory_space<vmem>>, vector<16x192xf32>
      tpu.vector_store %arg10[%c0_23, %c0_24], %38 {strides = array<i32>} : memref<16x192xf32, #tpu.memory_space<vmem>>, vector<16x192xf32>,
      %cst_25 = arith.constant 0.000000e+00 : f32
      %40 = vector.broadcast %cst_25 : f32 to vector<16x128xf32>
      %c0_26 = arith.constant 0 : index
      %c0_27 = arith.constant 0 : index
      %41 = vector.load %arg11[%c0_26, %c0_27] : memref<16x128xf32, #tpu.memory_space<vmem>>, vector<16x128xf32>
      tpu.vector_store %arg11[%c0_26, %c0_27], %40 {strides = array<i32>} : memref<16x128xf32, #tpu.memory_space<vmem>>, vector<16x128xf32>,
    } else {
    }
    %c0 = arith.constant 0 : index
    %c0_1 = arith.constant 0 : index
    %3 = vector.load %arg10[%c0, %c0_1] : memref<16x192xf32, #tpu.memory_space<vmem>>, vector<16x192xf32>
    %4 = vector.extract_strided_slice %3 {offsets = [0, 32], sizes = [16, 32], strides = [1, 1]} : vector<16x192xf32> to vector<16x32xf32>
    %5 = vector.extract_strided_slice %3 {offsets = [0, 64], sizes = [16, 128], strides = [1, 1]} : vector<16x192xf32> to vector<16x128xf32>
    %c0_2 = arith.constant 0 : index
    %c0_3 = arith.constant 0 : index
    %6 = vector.load %arg2[%c0_2, %c0_3] : memref<32x16xbf16, #tpu.memory_space<vmem>>, vector<32x16xbf16>
    %7 = arith.extf %6 : vector<32x16xbf16> to vector<32x16xf32>
    %c0_4 = arith.constant 0 : index
    %c0_5 = arith.constant 0 : index
    %8 = vector.load %arg3[%c0_4, %c0_5] : memref<32x16xbf16, #tpu.memory_space<vmem>>, vector<32x16xbf16>
    %9 = arith.extf %8 : vector<32x16xbf16> to vector<32x16xf32>
    %c0_6 = arith.constant 0 : index
    %c0_7 = arith.constant 0 : index
    %10 = vector.load %arg4[%c0_6, %c0_7] : memref<32x64xbf16, #tpu.memory_space<vmem>>, vector<32x64xbf16>
    %11 = arith.extf %10 : vector<32x64xbf16> to vector<32x64xf32>
    %cst = arith.constant dense<0.000000e+00> : vector<32x32xf32>
    %12 = tpu.matmul %7, %4, %cst {dimension_numbers = #tpu.dot_dimension_numbers<[1], [0], [0], [1], [0, 0, 1, 1], [], []>} : vector<32x16xf32>, vector<16x32xf32>, vector<32x32xf32> -> vector<32x32xf32>
    %cst_8 = arith.constant dense<0.000000e+00> : vector<32x128xf32>
    %13 = tpu.matmul %9, %5, %cst_8 {dimension_numbers = #tpu.dot_dimension_numbers<[1], [0], [0], [1], [0, 0, 1, 1], [], []>} : vector<32x16xf32>, vector<16x128xf32>, vector<32x128xf32> -> vector<32x128xf32>
    %14 = vector.extract_strided_slice %13 {offsets = [0, 0], sizes = [32, 64], strides = [1, 1]} : vector<32x128xf32> to vector<32x64xf32>
    %15 = vector.extract_strided_slice %13 {offsets = [0, 64], sizes = [32, 64], strides = [1, 1]} : vector<32x128xf32> to vector<32x64xf32>
    %16 = tpu.concatenate %12, %12 in 1 : vector<32x32xf32>, vector<32x32xf32> -> vector<32x64xf32>
    %17 = arith.addf %16, %15 : vector<32x64xf32>
    %18 = arith.negf %17 : vector<32x64xf32>
    %19 = math.exp %18 : vector<32x64xf32>
    %cst_9 = arith.constant 1.000000e+00 : f32
    %20 = vector.broadcast %cst_9 : f32 to vector<32x64xf32>
    %21 = arith.addf %20, %19 : vector<32x64xf32>
    %22 = arith.divf %20, %21 : vector<32x64xf32>
    %23 = arith.mulf %22, %11 : vector<32x64xf32>
    %24 = arith.mulf %23, %14 : vector<32x64xf32>
    %25 = tpu.concatenate %24, %23 in 1 : vector<32x64xf32>, vector<32x64xf32> -> vector<32x128xf32>
    %c0_10 = arith.constant 0 : index
    %c0_11 = arith.constant 0 : index
    %26 = vector.load %arg11[%c0_10, %c0_11] : memref<16x128xf32, #tpu.memory_space<vmem>>, vector<16x128xf32>
    %cst_12 = arith.constant dense<0.000000e+00> : vector<16x128xf32>
    %27 = tpu.matmul %7, %25, %cst_12 {dimension_numbers = #tpu.dot_dimension_numbers<[0], [0], [1], [1], [0, 1, 1, 1], [], []>} : vector<32x16xf32>, vector<32x128xf32>, vector<16x128xf32> -> vector<16x128xf32>
    %28 = arith.addf %26, %27 : vector<16x128xf32>
    %c0_13 = arith.constant 0 : index
    %c0_14 = arith.constant 0 : index
    %29 = vector.load %arg11[%c0_13, %c0_14] : memref<16x128xf32, #tpu.memory_space<vmem>>, vector<16x128xf32>
    tpu.vector_store %arg11[%c0_13, %c0_14], %28 {strides = array<i32>} : memref<16x128xf32, #tpu.memory_space<vmem>>, vector<16x128xf32>,
    %c1_i32 = arith.constant 1 : i32
    %30 = arith.cmpi eq, %arg0, %c1_i32 : i32
    %31 = arith.extui %30 : i1 to i32
    %c0_i32_15 = arith.constant 0 : i32
    %32 = arith.cmpi ne, %31, %c0_i32_15 : i32
    scf.if %32 {
      %c0_16 = arith.constant 0 : index
      %c0_17 = arith.constant 0 : index
      %33 = vector.load %arg11[%c0_16, %c0_17] : memref<16x128xf32, #tpu.memory_space<vmem>>, vector<16x128xf32>
      %34 = vector.extract_strided_slice %33 {offsets = [0, 0], sizes = [16, 64], strides = [1, 1]} : vector<16x128xf32> to vector<16x64xf32>
      %35 = vector.extract_strided_slice %33 {offsets = [0, 64], sizes = [16, 64], strides = [1, 1]} : vector<16x128xf32> to vector<16x64xf32>
      %cst_18 = arith.constant 9.99999997E-7 : f32
      %36 = vector.broadcast %cst_18 : f32 to vector<16x64xf32>
      %37 = arith.addf %35, %36 : vector<16x64xf32>
      %38 = tpu.reciprocal %37 : vector<16x64xf32> -> vector<16x64xf32>
      %39 = arith.mulf %34, %38 : vector<16x64xf32>
      %40 = vector.extract_strided_slice %39 {offsets = [0, 0], sizes = [16, 32], strides = [1, 1]} : vector<16x64xf32> to vector<16x32xf32>
      %41 = vector.extract_strided_slice %39 {offsets = [0, 32], sizes = [16, 32], strides = [1, 1]} : vector<16x64xf32> to vector<16x32xf32>
      %42 = arith.addf %40, %41 : vector<16x32xf32>
      %43 = vector.extract_strided_slice %3 {offsets = [0, 0], sizes = [16, 32], strides = [1, 1]} : vector<16x192xf32> to vector<16x32xf32>
      %cst_19 = arith.constant 5.000000e-01 : f32
      %44 = vector.broadcast %cst_19 : f32 to vector<16x32xf32>
      %45 = arith.mulf %44, %42 : vector<16x32xf32>
      %46 = arith.addf %43, %45 : vector<16x32xf32>
      %cst_20 = arith.constant dense<0.000000e+00> : vector<32xf32>
      %47 = vector.multi_reduction <add>, %46, %cst_20 [0] : vector<16x32xf32> to vector<32xf32>
      %48 = vector.shape_cast %47 : vector<32xf32> to vector<1x32xf32>
      %cst_21 = arith.constant 6.250000e-02 : f32
      %49 = vector.broadcast %cst_21 : f32 to vector<1x32xf32>
      %50 = arith.mulf %48, %49 : vector<1x32xf32>
      %51 = arith.mulf %46, %46 : vector<16x32xf32>
      %cst_22 = arith.constant dense<0.000000e+00> : vector<32xf32>
      %52 = vector.multi_reduction <add>, %51, %cst_22 [0] : vector<16x32xf32> to vector<32xf32>
      %53 = vector.shape_cast %52 : vector<32xf32> to vector<1x32xf32>
      %cst_23 = arith.constant 6.250000e-02 : f32
      %54 = vector.broadcast %cst_23 : f32 to vector<1x32xf32>
      %55 = arith.mulf %53, %54 : vector<1x32xf32>
      %56 = arith.mulf %50, %50 : vector<1x32xf32>
      %57 = arith.subf %55, %56 : vector<1x32xf32>
      %58 = vector.broadcast %50 : vector<1x32xf32> to vector<16x32xf32>
      %59 = arith.subf %46, %58 : vector<16x32xf32>
      %cst_24 = arith.constant 9.99999974E-6 : f32
      %60 = vector.broadcast %cst_24 : f32 to vector<1x32xf32>
      %61 = arith.addf %57, %60 : vector<1x32xf32>
      %62 = math.rsqrt %61 : vector<1x32xf32>
      %63 = vector.broadcast %62 : vector<1x32xf32> to vector<16x32xf32>
      %64 = arith.mulf %59, %63 : vector<16x32xf32>
      %c0_25 = arith.constant 0 : index
      %c0_26 = arith.constant 0 : index
      %65 = vector.load %arg7[%c0_25, %c0_26] : memref<1x32xf32, #tpu.memory_space<vmem>>, vector<1x32xf32>
      %66 = vector.broadcast %65 : vector<1x32xf32> to vector<16x32xf32>
      %67 = arith.mulf %64, %66 : vector<16x32xf32>
      %c0_27 = arith.constant 0 : index
      %c0_28 = arith.constant 0 : index
      %68 = vector.load %arg8[%c0_27, %c0_28] : memref<1x32xf32, #tpu.memory_space<vmem>>, vector<1x32xf32>
      %69 = vector.broadcast %68 : vector<1x32xf32> to vector<16x32xf32>
      %70 = arith.addf %67, %69 : vector<16x32xf32>
      %cst_29 = arith.constant 0.000000e+00 : f32
      %71 = vector.broadcast %cst_29 : f32 to vector<16x32xf32>
      %72 = arith.maximumf %70, %71 : vector<16x32xf32>
      %c0_30 = arith.constant 0 : index
      %c0_31 = arith.constant 0 : index
      %73 = vector.load %arg9[%c0_30, %c0_31] : memref<16x32xf32, #tpu.memory_space<vmem>>, vector<16x32xf32>
      tpu.vector_store %arg9[%c0_30, %c0_31], %72 {strides = array<i32>} : memref<16x32xf32, #tpu.memory_space<vmem>>, vector<16x32xf32>,
    } else {
    }
    return
  }
  func.func @transform_0(%arg0: i32) -> (i32, i32) {
    %c0_i32 = arith.constant 0 : i32
    %c0_i32_0 = arith.constant 0 : i32
    %c0_i32_1 = arith.constant 0 : i32
    return %c0_i32, %c0_i32_0 : i32, i32
  }
  func.func @transform_1(%arg0: i32) -> (i32, i32) {
    %c0_i32 = arith.constant 0 : i32
    %c0_i32_0 = arith.constant 0 : i32
    return %arg0, %c0_i32 : i32, i32
  }
  func.func @transform_2(%arg0: i32) -> (i32, i32) {
    %c0_i32 = arith.constant 0 : i32
    %c0_i32_0 = arith.constant 0 : i32
    return %arg0, %c0_i32 : i32, i32
  }
  func.func @transform_3(%arg0: i32) -> (i32, i32) {
    %c0_i32 = arith.constant 0 : i32
    %c0_i32_0 = arith.constant 0 : i32
    return %arg0, %c0_i32 : i32, i32
  }
  func.func @transform_4(%arg0: i32) -> (i32, i32) {
    %c0_i32 = arith.constant 0 : i32
    %c0_i32_0 = arith.constant 0 : i32
    %c0_i32_1 = arith.constant 0 : i32
    return %c0_i32, %c0_i32_0 : i32, i32
  }
  func.func @transform_5(%arg0: i32) -> (i32, i32) {
    %c0_i32 = arith.constant 0 : i32
    %c0_i32_0 = arith.constant 0 : i32
    %c0_i32_1 = arith.constant 0 : i32
    return %c0_i32, %c0_i32_0 : i32, i32
  }
  func.func @transform_6(%arg0: i32) -> (i32, i32) {
    %c0_i32 = arith.constant 0 : i32
    %c0_i32_0 = arith.constant 0 : i32
    %c0_i32_1 = arith.constant 0 : i32
    return %c0_i32, %c0_i32_0 : i32, i32
  }
  func.func @transform_7(%arg0: i32) -> (i32, i32) {
    %c0_i32 = arith.constant 0 : i32
    %c0_i32_0 = arith.constant 0 : i32
    %c0_i32_1 = arith.constant 0 : i32
    return %c0_i32, %c0_i32_0 : i32, i32
  }
  func.func @transform_8(%arg0: i32) -> (i32, i32) {
    %c0_i32 = arith.constant 0 : i32
    %c0_i32_0 = arith.constant 0 : i32
    %c0_i32_1 = arith.constant 0 : i32
    return %c0_i32, %c0_i32_0 : i32, i32
  }
}

</mosaic_0001>

<llo_original>
// kernel: tpu_custom_call.1
$region0: #{tpu_custom_call.1}
  #allocation0 [shape = 'u32[]', space=smem, size = 0x4, offset = 0x4, fixed_abs, tag = 'smem constant byte address 0x4 - core index']
  #allocation1 [shape = 'u32[72,128]{1,0:T(1,128)}', space=vmem, size = 0x9000, scoped, tag = 'internal scratch']
  #allocation2 [shape = 'f32[16,192]{1,0:T(8,128)}', space=vmem, size = 0x4000, scoped, tag = 'scratch operand']
  #allocation3 [shape = 'f32[16,128]{1,0:T(8,128)}', space=vmem, size = 0x2000, scoped, tag = 'scratch operand']
  %s0 = inlined_call_operand.hbm [shape: f32[16,32], index: 0, kind: input, shape index: {}]
  %s1 = inlined_call_operand.vmem [shape: bf16[64,16], index: 1, kind: input, shape index: {}]
  %s2 = inlined_call_operand.vmem [shape: bf16[64,16], index: 2, kind: input, shape index: {}]
  %s3 = inlined_call_operand.hbm [shape: bf16[64,64], index: 3, kind: input, shape index: {}]
  %s4 = inlined_call_operand.vmem [shape: f32[32,192], index: 4, kind: input, shape index: {}]
  %s5 = inlined_call_operand.vmem [shape: f32[1,192], index: 5, kind: input, shape index: {}]
  %s6 = inlined_call_operand.vmem [shape: f32[1,32], index: 6, kind: input, shape index: {}]
  %s7 = inlined_call_operand.vmem [shape: f32[1,32], index: 7, kind: input, shape index: {}]
  %s8 = inlined_call_operand.hbm [shape: f32[16,32], index: 8, kind: output, shape index: {}]
  %s9 = sld [smem:[#allocation0]]
  $region81: #{tpu_custom_call.1} parent=0
    _
  %s11 = ssub.s32 1, %s9
  %s12 = scalar_select 0, %s11, %s9
  $region1: #{tpu_custom_call.1} parent=0
    #allocation4 [shape = 'u8[8192]{0}', space=vmem, size = 0x2000, scoped, tag = 'input window, operand 0, single buffered']
    #allocation5 [shape = 's32[2]{0}', space=sflag, size = 0x8, scoped, tag = 'scoped memory for tpu_custom_call.1']
    #allocation6 [shape = 's32[2]{0}', space=sflag, size = 0x8, scoped, tag = 'scoped memory for tpu_custom_call.1']
    #allocation7 [shape = 'u8[16384]{0}', space=vmem, size = 0x4000, scoped, tag = 'input window, operand 3']
    #allocation8 [shape = 's32[2]{0}', space=sflag, size = 0x8, scoped, tag = 'scoped memory for tpu_custom_call.1']
    #allocation9 [shape = 'u8[8192]{0}', space=vmem, size = 0x2000, scoped, tag = 'output window, operand 0, single buffered']
    %13 = vsyncpa [#allocation5], 0
    %14 = vsyncpa [#allocation8], 0
    %s15 = scalar_lea.sflag [#allocation8], 1
    %16 = vsyncpa %s15, 0
    %17 = vsyncpa [#allocation6], 0
    loop: start=0, step=1, limit=4
    $region2: #{tpu_custom_call.1} parent=1 // loop_pre_header
      _
    $region3: #{tpu_custom_call.1} parent=1 // loop_header
      %s19 = sphi 0, %s23
      %p20 = scmp.ge.s32.totalorder %s19, 4
      %s27 = sphi 0, %s27
      %s29 = sphi 0, %s27
      %s30 = sphi 0, %s29
      %s44 = sphi 0, %s30
      %s50 = sphi 0, %s52
      %s53 = sphi 0, %s50
      %s54 = sphi 0, %s53
      %s70 = sphi 0, %s54
      %s76 = sphi 0, %s78
      %s79 = sphi 0, %s76
      %s80 = sphi 0, %s79
      %s96 = sphi 0, %s80
      %s102 = sphi 0, %s104
      %s105 = sphi 0, %s102
      %s106 = sphi 0, %s105
      %s122 = sphi 0, %s106
      %s126 = sphi 0, %s126
      %s128 = sphi 0, %s126
      %s129 = sphi 0, %s128
      %s143 = sphi 0, %s129
      %s147 = sphi 0, %s147
      %s149 = sphi 0, %s147
      %s150 = sphi 0, %s149
      %s164 = sphi 0, %s150
      %s168 = sphi 0, %s168
      %s170 = sphi 0, %s168
      %s171 = sphi 0, %s170
      %s185 = sphi 0, %s171
      %s189 = sphi 0, %s189
      %s191 = sphi 0, %s189
      %s192 = sphi 0, %s191
      %s206 = sphi 0, %s192
      %s210 = sphi 0, %s210
      %s212 = sphi 0, %s210
      %s213 = sphi 0, %s212
      %s227 = sphi 0, %s213
    $region4: #{tpu_custom_call.1} parent=1 // loop_header_branch
      %22 = sbr.rel (%p20) target = $region8
    $region5: #{tpu_custom_call.1} parent=1 // loop_body
      %s24 = ssub.s32 %s19, 1
      %s25 = ssub.s32 %s19, 2
      %s26 = sadd.s32 %s19, 1
      %s28 = sadd.s32 %s27, 1
      %p31 = scmp.eq.s32.totalorder %s19, 1
      %p32 = scmp.ne.s32.totalorder %s27, %s29
      %p33 = scmp.eq.s32.totalorder %s19, 0
      %p34 = por %p32, %p33
      %p35 = scmp.ne.s32.totalorder %s27, %s29
      %p36 = scmp.eq.s32.totalorder %s24, 1
      %p37 = por %p35, %p36
      %p38 = scmp.ne.s32.totalorder %s29, %s30
      %p39 = scmp.eq.s32.totalorder %s24, 0
      %p40 = por %p38, %p39
      %p41 = scmp.ne.s32.totalorder %s29, %s30
      %p42 = scmp.eq.s32.totalorder %s25, 1
      %p43 = por %p41, %p42
      %p45 = scmp.ne.s32.totalorder %s30, %s44
      %p46 = scmp.eq.s32.totalorder %s25, 0
      %p47 = por %p45, %p46
      %s48 = ssub.s32 %s19, %s26
      %p49 = scmp.eq.s32.totalorder %s48, 0
      %s51 = sadd.s32 %s50, 1
      %s52 = scalar_select %p49, %s50, %s51
      %p55 = pneg %p49
      %p56 = scmp.eq.s32.totalorder %s19, 1
      %p57 = por %p55, %p56
      %p58 = scmp.ne.s32.totalorder %s50, %s53
      %p59 = scmp.eq.s32.totalorder %s19, 0
      %p60 = por %p58, %p59
      %p61 = scmp.ne.s32.totalorder %s50, %s53
      %p62 = scmp.eq.s32.totalorder %s24, 1
      %p63 = por %p61, %p62
      %p64 = scmp.ne.s32.totalorder %s53, %s54
      %p65 = scmp.eq.s32.totalorder %s24, 0
      %p66 = por %p64, %p65
      %p67 = scmp.ne.s32.totalorder %s53, %s54
      %p68 = scmp.eq.s32.totalorder %s25, 1
      %p69 = por %p67, %p68
      %p71 = scmp.ne.s32.totalorder %s54, %s70
      %p72 = scmp.eq.s32.totalorder %s25, 0
      %p73 = por %p71, %p72
      %s74 = ssub.s32 %s19, %s26
      %p75 = scmp.eq.s32.totalorder %s74, 0
      %s77 = sadd.s32 %s76, 1
      %s78 = scalar_select %p75, %s76, %s77
      %p81 = pneg %p75
      %p82 = scmp.eq.s32.totalorder %s19, 1
      %p83 = por %p81, %p82
      %p84 = scmp.ne.s32.totalorder %s76, %s79
      %p85 = scmp.eq.s32.totalorder %s19, 0
      %p86 = por %p84, %p85
      %p87 = scmp.ne.s32.totalorder %s76, %s79
      %p88 = scmp.eq.s32.totalorder %s24, 1
      %p89 = por %p87, %p88
      %p90 = scmp.ne.s32.totalorder %s79, %s80
      %p91 = scmp.eq.s32.totalorder %s24, 0
      %p92 = por %p90, %p91
      %p93 = scmp.ne.s32.totalorder %s79, %s80
      %p94 = scmp.eq.s32.totalorder %s25, 1
      %p95 = por %p93, %p94
      %p97 = scmp.ne.s32.totalorder %s80, %s96
      %p98 = scmp.eq.s32.totalorder %s25, 0
      %p99 = por %p97, %p98
      %s100 = ssub.s32 %s19, %s26
      %p101 = scmp.eq.s32.totalorder %s100, 0
      %s103 = sadd.s32 %s102, 1
      %s104 = scalar_select %p101, %s102, %s103
      %p107 = pneg %p101
      %p108 = scmp.eq.s32.totalorder %s19, 1
      %p109 = por %p107, %p108
      %p110 = scmp.ne.s32.totalorder %s102, %s105
      %p111 = scmp.eq.s32.totalorder %s19, 0
      %p112 = por %p110, %p111
      %p113 = scmp.ne.s32.totalorder %s102, %s105
      %p114 = scmp.eq.s32.totalorder %s24, 1
      %p115 = por %p113, %p114
      %p116 = scmp.ne.s32.totalorder %s105, %s106
      %p117 = scmp.eq.s32.totalorder %s24, 0
      %p118 = por %p116, %p117
      %p119 = scmp.ne.s32.totalorder %s105, %s106
      %p120 = scmp.eq.s32.totalorder %s25, 1
      %p121 = por %p119, %p120
      %p123 = scmp.ne.s32.totalorder %s106, %s122
      %p124 = scmp.eq.s32.totalorder %s25, 0
      %p125 = por %p123, %p124
      %s127 = sadd.s32 %s126, 1
      %p130 = scmp.eq.s32.totalorder %s19, 1
      %p131 = scmp.ne.s32.totalorder %s126, %s128
      %p132 = scmp.eq.s32.totalorder %s19, 0
      %p133 = por %p131, %p132
      %p134 = scmp.ne.s32.totalorder %s126, %s128
      %p135 = scmp.eq.s32.totalorder %s24, 1
      %p136 = por %p134, %p135
      %p137 = scmp.ne.s32.totalorder %s128, %s129
      %p138 = scmp.eq.s32.totalorder %s24, 0
      %p139 = por %p137, %p138
      %p140 = scmp.ne.s32.totalorder %s128, %s129
      %p141 = scmp.eq.s32.totalorder %s25, 1
      %p142 = por %p140, %p141
      %p144 = scmp.ne.s32.totalorder %s129, %s143
      %p145 = scmp.eq.s32.totalorder %s25, 0
      %p146 = por %p144, %p145
      %s148 = sadd.s32 %s147, 1
      %p151 = scmp.eq.s32.totalorder %s19, 1
      %p152 = scmp.ne.s32.totalorder %s147, %s149
      %p153 = scmp.eq.s32.totalorder %s19, 0
      %p154 = por %p152, %p153
      %p155 = scmp.ne.s32.totalorder %s147, %s149
      %p156 = scmp.eq.s32.totalorder %s24, 1
      %p157 = por %p155, %p156
      %p158 = scmp.ne.s32.totalorder %s149, %s150
      %p159 = scmp.eq.s32.totalorder %s24, 0
      %p160 = por %p158, %p159
      %p161 = scmp.ne.s32.totalorder %s149, %s150
      %p162 = scmp.eq.s32.totalorder %s25, 1
      %p163 = por %p161, %p162
      %p165 = scmp.ne.s32.totalorder %s150, %s164
      %p166 = scmp.eq.s32.totalorder %s25, 0
      %p167 = por %p165, %p166
      %s169 = sadd.s32 %s168, 1
      %p172 = scmp.eq.s32.totalorder %s19, 1
      %p173 = scmp.ne.s32.totalorder %s168, %s170
      %p174 = scmp.eq.s32.totalorder %s19, 0
      %p175 = por %p173, %p174
      %p176 = scmp.ne.s32.totalorder %s168, %s170
      %p177 = scmp.eq.s32.totalorder %s24, 1
      %p178 = por %p176, %p177
      %p179 = scmp.ne.s32.totalorder %s170, %s171
      %p180 = scmp.eq.s32.totalorder %s24, 0
      %p181 = por %p179, %p180
      %p182 = scmp.ne.s32.totalorder %s170, %s171
      %p183 = scmp.eq.s32.totalorder %s25, 1
      %p184 = por %p182, %p183
      %p186 = scmp.ne.s32.totalorder %s171, %s185
      %p187 = scmp.eq.s32.totalorder %s25, 0
      %p188 = por %p186, %p187
      %s190 = sadd.s32 %s189, 1
      %p193 = scmp.eq.s32.totalorder %s19, 1
      %p194 = scmp.ne.s32.totalorder %s189, %s191
      %p195 = scmp.eq.s32.totalorder %s19, 0
      %p196 = por %p194, %p195
      %p197 = scmp.ne.s32.totalorder %s189, %s191
      %p198 = scmp.eq.s32.totalorder %s24, 1
      %p199 = por %p197, %p198
      %p200 = scmp.ne.s32.totalorder %s191, %s192
      %p201 = scmp.eq.s32.totalorder %s24, 0
      %p202 = por %p200, %p201
      %p203 = scmp.ne.s32.totalorder %s191, %s192
      %p204 = scmp.eq.s32.totalorder %s25, 1
      %p205 = por %p203, %p204
      %p207 = scmp.ne.s32.totalorder %s192, %s206
      %p208 = scmp.eq.s32.totalorder %s25, 0
      %p209 = por %p207, %p208
      %s211 = sadd.s32 %s210, 1
      %p214 = scmp.eq.s32.totalorder %s19, 1
      %p215 = scmp.ne.s32.totalorder %s210, %s212
      %p216 = scmp.eq.s32.totalorder %s19, 0
      %p217 = por %p215, %p216
      %p218 = scmp.ne.s32.totalorder %s210, %s212
      %p219 = scmp.eq.s32.totalorder %s24, 1
      %p220 = por %p218, %p219
      %p221 = scmp.ne.s32.totalorder %s212, %s213
      %p222 = scmp.eq.s32.totalorder %s24, 0
      %p223 = por %p221, %p222
      %p224 = scmp.ne.s32.totalorder %s212, %s213
      %p225 = scmp.eq.s32.totalorder %s25, 1
      %p226 = por %p224, %p225
      %p228 = scmp.ne.s32.totalorder %s213, %s227
      %p229 = scmp.eq.s32.totalorder %s25, 0
      %p230 = por %p228, %p229
      %p231 = scmp.le.s32.totalorder 1, %s19
      %p232 = scmp.lt.s32.totalorder %s19, 3
      %p233 = pnand %p231, %p232
      %p234 = pneg %p233
      // Predicated region
      $region9: #{tpu_custom_call.1} parent=5 // pred_check
        _
      $region10: #{tpu_custom_call.1} parent=5 // pred_check_branch
        %236 = sbr.rel (%p233) target = $region12
      $region11: #{tpu_custom_call.1} parent=5 // pred_region
        %s237 = ssub.s32 %s19, 1
        // Predicated region
        $region13: #{tpu_custom_call.1} parent=11 // pred_check
          %p238 = pneg %p40
        $region14: #{tpu_custom_call.1} parent=11 // pred_check_branch
          %240 = sbr.rel (%p238) target = $region16
        $region15: #{tpu_custom_call.1} parent=11 // pred_region
          %242 = vsyncadd [#allocation5], 0
          %s243 = sshll.u32 %s0, 4
          %s244 = int_to_ptr.hbm [resolvable:$true] %s243
          %s245 = sshll.u32 [#allocation4], 4
          %s246 = int_to_ptr.vmem [resolvable:$true] %s245
          %251 = dma.hbm_to_vmem [thread:$0]  %s244, 256, %s246, [#allocation5], 128, 128, 8
        $region16: #{tpu_custom_call.1} parent=11 // pred_fallthru
          _
        // Predicated region
        $region17: #{tpu_custom_call.1} parent=11 // pred_check
          %p252 = pneg %p139
        $region18: #{tpu_custom_call.1} parent=11 // pred_check_branch
          %254 = sbr.rel (%p252) target = $region20
        $region19: #{tpu_custom_call.1} parent=11 // pred_region
          _
        $region20: #{tpu_custom_call.1} parent=11 // pred_fallthru
          _
        // Predicated region
        $region21: #{tpu_custom_call.1} parent=11 // pred_check
          %p255 = pneg %p160
        $region22: #{tpu_custom_call.1} parent=11 // pred_check_branch
          %257 = sbr.rel (%p255) target = $region24
        $region23: #{tpu_custom_call.1} parent=11 // pred_region
          _
        $region24: #{tpu_custom_call.1} parent=11 // pred_fallthru
          _
        // Predicated region
        $region25: #{tpu_custom_call.1} parent=11 // pred_check
          %p258 = pneg %p181
        $region26: #{tpu_custom_call.1} parent=11 // pred_check_branch
          %260 = sbr.rel (%p258) target = $region28
        $region27: #{tpu_custom_call.1} parent=11 // pred_region
          _
        $region28: #{tpu_custom_call.1} parent=11 // pred_fallthru
          _
        // Predicated region
        $region29: #{tpu_custom_call.1} parent=11 // pred_check
          %p261 = pneg %p202
        $region30: #{tpu_custom_call.1} parent=11 // pred_check_branch
          %263 = sbr.rel (%p261) target = $region32
        $region31: #{tpu_custom_call.1} parent=11 // pred_region
          _
        $region32: #{tpu_custom_call.1} parent=11 // pred_fallthru
          _
      $region12: #{tpu_custom_call.1} parent=5 // pred_fallthru
        _
      %p264 = scmp.lt.s32.totalorder %s19, 2
      // Predicated region
      $region33: #{tpu_custom_call.1} parent=5 // pred_check
        %p265 = pneg %p264
      $region34: #{tpu_custom_call.1} parent=5 // pred_check_branch
        %267 = sbr.rel (%p265) target = $region36
      $region35: #{tpu_custom_call.1} parent=5 // pred_region
        // Predicated region
        $region37: #{tpu_custom_call.1} parent=35 // pred_check
          %p268 = pneg %p60
        $region38: #{tpu_custom_call.1} parent=35 // pred_check_branch
          %270 = sbr.rel (%p268) target = $region40
        $region39: #{tpu_custom_call.1} parent=35 // pred_region
          %s271 = smul.u32 4, %s19
          %p272 = scmp.lt.s32.totalorder %s271, 7
          %s273 = scalar_select %p272, %s271, 7
          %s274 = smul.addr %s273, 4
          %s275 = scalar_lea.vmem %s1, %s274
          %s276 = smul.u32 4, %s19
        $region40: #{tpu_custom_call.1} parent=35 // pred_fallthru
          _
        // Predicated region
        $region41: #{tpu_custom_call.1} parent=35 // pred_check
          %p277 = pneg %p86
        $region42: #{tpu_custom_call.1} parent=35 // pred_check_branch
          %279 = sbr.rel (%p277) target = $region44
        $region43: #{tpu_custom_call.1} parent=35 // pred_region
          %s280 = smul.u32 4, %s19
          %p281 = scmp.lt.s32.totalorder %s280, 7
          %s282 = scalar_select %p281, %s280, 7
          %s283 = smul.addr %s282, 4
          %s284 = scalar_lea.vmem %s2, %s283
          %s285 = smul.u32 4, %s19
        $region44: #{tpu_custom_call.1} parent=35 // pred_fallthru
          _
        // Predicated region
        $region45: #{tpu_custom_call.1} parent=35 // pred_check
          %p286 = pneg %p112
        $region46: #{tpu_custom_call.1} parent=35 // pred_check_branch
          %288 = sbr.rel (%p286) target = $region48
        $region47: #{tpu_custom_call.1} parent=35 // pred_region
          %s289 = sand.u32 %s102, 1
          %s290 = scalar_lea.sflag [#allocation8], %s289
          %s291 = sand.u32 %s102, 1
          %s292 = smul.addr %s291, 16
          %s293 = scalar_lea.vmem [#allocation7], %s292
          %s294 = smul.u32 4, %s19
          %296 = vsyncadd %s290, 0
          %s297 = smul.addr %s294, 4
          %s298 = scalar_lea.hbm %s3, %s297
          %s299 = sshll.u32 %s298, 4
          %s300 = int_to_ptr.hbm [resolvable:$true] %s299
          %s301 = sshll.u32 %s293, 4
          %s302 = int_to_ptr.vmem [resolvable:$true] %s301
          %307 = dma.hbm_to_vmem [thread:$0]  %s300, 256, %s302, %s290, 64, 64, 4
        $region48: #{tpu_custom_call.1} parent=35 // pred_fallthru
          _
      $region36: #{tpu_custom_call.1} parent=5 // pred_fallthru
        _
      %p308 = scmp.le.s32.totalorder 1, %s19
      %p309 = scmp.lt.s32.totalorder %s19, 3
      %p310 = pnand %p308, %p309
      %p311 = pneg %p310
      // Predicated region
      $region49: #{tpu_custom_call.1} parent=5 // pred_check
        _
      $region50: #{tpu_custom_call.1} parent=5 // pred_check_branch
        %313 = sbr.rel (%p310) target = $region52
      $region51: #{tpu_custom_call.1} parent=5 // pred_region
        %s314 = ssub.s32 %s19, 1
        // Predicated region
        $region53: #{tpu_custom_call.1} parent=51 // pred_check
          %p315 = pneg %p40
        $region54: #{tpu_custom_call.1} parent=51 // pred_check_branch
          %317 = sbr.rel (%p315) target = $region56
        $region55: #{tpu_custom_call.1} parent=51 // pred_region
          %319 = dma.done [#allocation5], 256
        $region56: #{tpu_custom_call.1} parent=51 // pred_fallthru
          _
        %s320 = sand.u32 %s105, 1
        %s321 = scalar_lea.sflag [#allocation8], %s320
        %s322 = sand.u32 %s105, 1
        %s323 = smul.addr %s322, 16
        %s324 = scalar_lea.vmem [#allocation7], %s323
        // Predicated region
        $region57: #{tpu_custom_call.1} parent=51 // pred_check
          %p325 = pneg %p118
        $region58: #{tpu_custom_call.1} parent=51 // pred_check_branch
          %327 = sbr.rel (%p325) target = $region60
        $region59: #{tpu_custom_call.1} parent=51 // pred_region
          %329 = dma.done %s321, 256
        $region60: #{tpu_custom_call.1} parent=51 // pred_fallthru
          _
        %p330 = pneg %p40
        %p331 = pneg %p37
        %s332 = smul.u32 4, %s24
        %p333 = scmp.lt.s32.totalorder %s332, 7
        %s334 = scalar_select %p333, %s332, 7
        %s335 = smul.addr %s334, 4
        %s336 = scalar_lea.vmem %s1, %s335
        %p337 = pneg %p66
        %p338 = pneg %p63
        %s339 = smul.u32 4, %s24
        %p340 = scmp.lt.s32.totalorder %s339, 7
        %s341 = scalar_select %p340, %s339, 7
        %s342 = smul.addr %s341, 4
        %s343 = scalar_lea.vmem %s2, %s342
        %p344 = pneg %p92
        %p345 = pneg %p89
        %s346 = sand.u32 %s105, 1
        %s347 = scalar_lea.sflag [#allocation8], %s346
        %s348 = sand.u32 %s105, 1
        %s349 = smul.addr %s348, 16
        %s350 = scalar_lea.vmem [#allocation7], %s349
        %p351 = pneg %p118
        %p352 = pneg %p115
        %p353 = pneg %p139
        %p354 = pneg %p136
        %p355 = pneg %p160
        %p356 = pneg %p157
        %p357 = pneg %p181
        %p358 = pneg %p178
        %p359 = pneg %p202
        %p360 = pneg %p199
        %p361 = pneg %p223
        %p362 = pneg %p220
        %s363 = smul.u32 4, %s24
        %p364 = scmp.lt.s32.totalorder %s363, 7
        %s365 = scalar_select %p364, %s363, 7
        %s366 = smul.addr %s365, 4
        %s367 = scalar_lea.vmem %s1, %s366
        %s368 = smul.u32 4, %s24
        %s369 = smul.u32 4, %s24
        %p370 = scmp.lt.s32.totalorder %s369, 7
        %s371 = scalar_select %p370, %s369, 7
        %s372 = smul.addr %s371, 4
        %s373 = scalar_lea.vmem %s2, %s372
        %s374 = smul.u32 4, %s24
        %s375 = smul.u32 4, %s24
        %p376 = scmp.eq.s32.totalorder %s24, 0
        // Predicated region
        $region61: #{tpu_custom_call.1} parent=51 // pred_check
          %p377 = pneg %p376
        $region62: #{tpu_custom_call.1} parent=51 // pred_check_branch
          %379 = sbr.rel (%p377) target = $region64
        $region63: #{tpu_custom_call.1} parent=51 // pred_region
          %v380 = vld [vmem:[#allocation4] sm:$0xff]
          %v381 = vld [vmem:[#allocation4 + $0x8] sm:$0xff]
          %v382 = vld [vmem:[%s4] sm:$0xff]
          %v383 = vld [vmem:[%s4 + $0x8] sm:$0xff]
          %v384 = vld [vmem:[%s4 + $0x10] sm:$0xff]
          %v385 = vld [vmem:[%s4 + $0x18] sm:$0xff]
          %v386 = vld [vmem:[%s4 + $0x20] sm:$0xff]
          %v387 = vld [vmem:[%s4 + $0x28] sm:$0xff]
          %v388 = vld [vmem:[%s4 + $0x30] sm:$0xff]
          %v389 = vld [vmem:[%s4 + $0x38] sm:$0xff]
          %v390 = vld [vmem:[%s5] sm:$0x3]
          %v392 = vperm.slane %v390, 0
          %v393 = vperm.slane %v390, 1
          %vm396 = vcmask 261120
          %v398 = vsel %vm396, %v380, 0
          %v401 = vsel %vm396, %v381, 0
          %403 = vmatpush.msra.mxu0 0.0
          %404 = vmatpush.msra.mxu0 0.0
          %405 = vmatpush.msra.mxu0 0.0
          %406 = vmatpush.msra.mxu0 0.0
          %407 = vmatpush.msra.mxu0 0.0
          %408 = vmatpush.msra.mxu0 0.0
          %409 = vmatpush.msra.mxu0 0.0
          %410 = vmatpush.msra.mxu0 0.0
          %411 = vmatpush.msra.mxu0 0.0
          %412 = vmatpush.msra.mxu0 0.0
          %413 = vmatpush.msra.mxu0 0.0
          %414 = vmatpush.msra.mxu0 0.0
          %415 = vmatpush.msra.mxu0 %v388
          %416 = vmatpush.msra.mxu0 %v386
          %417 = vmatpush.msra.mxu0 %v384
          %418 = vmatpush.msra.mxu0 %v382
          %419 = vmatmul.f32.gmra.mxu0 %v398
          %v420 = vpop.f32.mrf.mxu0
          %v421 = vadd.f32 %v392, %v420
          %422 = vmatmul.f32.gmra.mxu0 %v401
          %v423 = vpop.f32.mrf.mxu0
          %v424 = vadd.f32 %v392, %v423
          %425 = vdwg.mxu0
          %426 = vmatpush.msra.mxu0 0.0
          %427 = vmatpush.msra.mxu0 0.0
          %428 = vmatpush.msra.mxu0 0.0
          %429 = vmatpush.msra.mxu0 0.0
          %430 = vmatpush.msra.mxu0 0.0
          %431 = vmatpush.msra.mxu0 0.0
          %432 = vmatpush.msra.mxu0 0.0
          %433 = vmatpush.msra.mxu0 0.0
          %434 = vmatpush.msra.mxu0 0.0
          %435 = vmatpush.msra.mxu0 0.0
          %436 = vmatpush.msra.mxu0 0.0
          %437 = vmatpush.msra.mxu0 0.0
          %438 = vmatpush.msra.mxu0 %v389
          %439 = vmatpush.msra.mxu0 %v387
          %440 = vmatpush.msra.mxu0 %v385
          %441 = vmatpush.msra.mxu0 %v383
          %442 = vmatmul.f32.gmra.mxu0 %v398
          %v443 = vpop.f32.mrf.mxu0
          %v444 = vadd.f32 %v393, %v443
          %445 = vmatmul.f32.gmra.mxu0 %v401
          %v446 = vpop.f32.mrf.mxu0
          %v447 = vadd.f32 %v393, %v446
          %448 = vdwg.mxu0
          %449 = vst [vmem:[#allocation2] sm:$0xff] %v421
          %vm450 = vcmask 523264
          %451 = vst.msk [vmem:[#allocation2 + $0x8] sm:$0xff] %vm450, %v444
          %452 = vst [vmem:[#allocation2 + $0x10] sm:$0xff] %v424
          %453 = vst.msk [vmem:[#allocation2 + $0x18] sm:$0xff] %vm450, %v447
          %454 = vst [vmem:[#allocation3] sm:$0xff] 0.0
          %455 = vst [vmem:[#allocation3 + $0x8] sm:$0xff] 0.0
        $region64: #{tpu_custom_call.1} parent=51 // pred_fallthru
          _
        %v456 = vld [vmem:[#allocation2] sm:$0xff]
        %v457 = vld [vmem:[#allocation2 + $0x8] sm:$0xff]
        %v458 = vld [vmem:[#allocation2 + $0x10] sm:$0xff]
        %v459 = vld [vmem:[#allocation2 + $0x18] sm:$0xff]
        %v460 = vld [vmem:[%s367] sm:$0xf]
        %v461 = vld [vmem:[%s367 + $0x4] sm:$0xf]
        %v462 = vld [vmem:[%s367 + $0x8] sm:$0xf]
        %v463 = vld [vmem:[%s367 + $0xc] sm:$0xf]
        %v464 = vunpack.c.l.bf16 %v460
        %v465 = vunpack.c.l.bf16 %v461
        %v466 = vunpack.c.l.bf16 %v462
        %v467 = vunpack.c.l.bf16 %v463
        %v468 = vld [vmem:[%s373] sm:$0xf]
        %v469 = vld [vmem:[%s373 + $0x4] sm:$0xf]
        %v470 = vld [vmem:[%s373 + $0x8] sm:$0xf]
        %v471 = vld [vmem:[%s373 + $0xc] sm:$0xf]
        %v472 = vunpack.c.l.bf16 %v468
        %v473 = vunpack.c.l.bf16 %v469
        %v474 = vunpack.c.l.bf16 %v470
        %v475 = vunpack.c.l.bf16 %v471
        %v476 = vld [vmem:[%s324] sm:$0xf]
        %v477 = vld [vmem:[%s324 + $0x4] sm:$0xf]
        %v478 = vld [vmem:[%s324 + $0x8] sm:$0xf]
        %v479 = vld [vmem:[%s324 + $0xc] sm:$0xf]
        %v480 = vunpack.c.l.bf16 %v476
        %v481 = vunpack.c.l.bf16 %v477
        %v482 = vunpack.c.l.bf16 %v478
        %v483 = vunpack.c.l.bf16 %v479
        %486 = vrot.lane.b32.xlu0 %v456, 96
        %v487 = vpop.permute.xlu0 %486
        %488 = vrot.lane.b32.xlu0 %v458, 96
        %v489 = vpop.permute.xlu0 %488
        %vm492 = vcmask 130048
        %v494 = vsel %vm492, %v464, 0
        %v497 = vsel %vm492, %v465, 0
        %v500 = vsel %vm492, %v466, 0
        %v503 = vsel %vm492, %v467, 0
        %505 = vmatpush.msra.mxu0 0.0
        %506 = vmatpush.msra.mxu0 0.0
        %507 = vmatpush.msra.mxu0 0.0
        %508 = vmatpush.msra.mxu0 0.0
        %509 = vmatpush.msra.mxu0 0.0
        %510 = vmatpush.msra.mxu0 0.0
        %511 = vmatpush.msra.mxu0 0.0
        %512 = vmatpush.msra.mxu0 0.0
        %513 = vmatpush.msra.mxu0 0.0
        %514 = vmatpush.msra.mxu0 0.0
        %515 = vmatpush.msra.mxu0 0.0
        %516 = vmatpush.msra.mxu0 0.0
        %517 = vmatpush.msra.mxu0 0.0
        %518 = vmatpush.msra.mxu0 0.0
        %519 = vmatpush.msra.mxu0 %v489
        %520 = vmatpush.msra.mxu0 %v487
        %521 = vmatmul.f32.gmra.mxu0 %v494
        %v522 = vpop.f32.mrf.mxu0
        %v523 = vadd.f32 0.0, %v522
        %524 = vmatmul.f32.gmra.mxu0 %v497
        %v525 = vpop.f32.mrf.mxu0
        %v526 = vadd.f32 0.0, %v525
        %527 = vmatmul.f32.gmra.mxu0 %v500
        %v528 = vpop.f32.mrf.mxu0
        %v529 = vadd.f32 0.0, %v528
        %530 = vmatmul.f32.gmra.mxu0 %v503
        %v531 = vpop.f32.mrf.mxu0
        %v532 = vadd.f32 0.0, %v531
        %533 = vdwg.mxu0
        %536 = vrot.lane.b32.xlu0 %v456, 64
        %v537 = vpop.permute.xlu0 %536
        %538 = vrot.lane.b32.xlu0 %v457, 64
        %v539 = vpop.permute.xlu0 %538
        %540 = vrot.lane.b32.xlu0 %v458, 64
        %v541 = vpop.permute.xlu0 %540
        %542 = vrot.lane.b32.xlu0 %v459, 64
        %v543 = vpop.permute.xlu0 %542
        %vm544 = vcmask 523264
        %v545 = vsel %vm544, %v537, %v539
        %v546 = vsel %vm544, %v541, %v543
        %v550 = vsel %vm492, %v472, 0
        %v553 = vsel %vm492, %v473, 0
        %v556 = vsel %vm492, %v474, 0
        %v559 = vsel %vm492, %v475, 0
        %561 = vmatpush.msra.mxu0 0.0
        %562 = vmatpush.msra.mxu0 0.0
        %563 = vmatpush.msra.mxu0 0.0
        %564 = vmatpush.msra.mxu0 0.0
        %565 = vmatpush.msra.mxu0 0.0
        %566 = vmatpush.msra.mxu0 0.0
        %567 = vmatpush.msra.mxu0 0.0
        %568 = vmatpush.msra.mxu0 0.0
        %569 = vmatpush.msra.mxu0 0.0
        %570 = vmatpush.msra.mxu0 0.0
        %571 = vmatpush.msra.mxu0 0.0
        %572 = vmatpush.msra.mxu0 0.0
        %573 = vmatpush.msra.mxu0 0.0
        %574 = vmatpush.msra.mxu0 0.0
        %575 = vmatpush.msra.mxu0 %v546
        %576 = vmatpush.msra.mxu0 %v545
        %577 = vmatmul.f32.gmra.mxu0 %v550
        %v578 = vpop.f32.mrf.mxu0
        %v579 = vadd.f32 0.0, %v578
        %580 = vmatmul.f32.gmra.mxu0 %v553
        %v581 = vpop.f32.mrf.mxu0
        %v582 = vadd.f32 0.0, %v581
        %583 = vmatmul.f32.gmra.mxu0 %v556
        %v584 = vpop.f32.mrf.mxu0
        %v585 = vadd.f32 0.0, %v584
        %586 = vmatmul.f32.gmra.mxu0 %v559
        %v587 = vpop.f32.mrf.mxu0
        %v588 = vadd.f32 0.0, %v587
        %589 = vdwg.mxu0
        %594 = vrot.lane.b32.xlu0 %v523, 32
        %v595 = vpop.permute.xlu0 %594
        %596 = vrot.lane.b32.xlu0 %v526, 32
        %v597 = vpop.permute.xlu0 %596
        %598 = vrot.lane.b32.xlu0 %v529, 32
        %v599 = vpop.permute.xlu0 %598
        %600 = vrot.lane.b32.xlu0 %v532, 32
        %v601 = vpop.permute.xlu0 %600
        %vm606 = vcmask 261120
        %v607 = vsel %vm606, %v523, %v595
        %v608 = vsel %vm606, %v526, %v597
        %v609 = vsel %vm606, %v529, %v599
        %v610 = vsel %vm606, %v532, %v601
        %615 = vrot.lane.b32.xlu0 %v579, 64
        %v616 = vpop.permute.xlu0 %615
        %617 = vrot.lane.b32.xlu0 %v582, 64
        %v618 = vpop.permute.xlu0 %617
        %619 = vrot.lane.b32.xlu0 %v585, 64
        %v620 = vpop.permute.xlu0 %619
        %621 = vrot.lane.b32.xlu0 %v588, 64
        %v622 = vpop.permute.xlu0 %621
        %v627 = vadd.f32 %v607, %v616
        %v628 = vadd.f32 %v608, %v618
        %v629 = vadd.f32 %v609, %v620
        %v630 = vadd.f32 %v610, %v622
        %v631 = vxor.u32 %v627, 2147483648
        %v632 = vxor.u32 %v628, 2147483648
        %v633 = vxor.u32 %v629, 2147483648
        %v634 = vxor.u32 %v630, 2147483648
        %v635 = vmul.f32 %v631, 1.442695
        %v636 = vpow.pop %v635
        %v637 = vmul.f32 %v632, 1.442695
        %v638 = vpow.pop %v637
        %v639 = vmul.f32 %v633, 1.442695
        %v640 = vpow.pop %v639
        %v641 = vmul.f32 %v634, 1.442695
        %v642 = vpow.pop %v641
        %v643 = vadd.f32 %v636, 1.0
        %v644 = vadd.f32 %v638, 1.0
        %v645 = vadd.f32 %v640, 1.0
        %v646 = vadd.f32 %v642, 1.0
        %v647 = vrcp.pop %v643
        %v648 = vmul.f32 %v643, %v647
        %v649 = vsub.f32 1.0, %v648
        %v650 = vmul.f32 %v647, %v649
        %v651 = vadd.f32 %v647, %v650
        %vm652 = vweird.f32 %v643
        %vm653 = vweird.f32 %v647
        %vm654 = vmor %vm652, %vm653
        %v655 = vsel %vm654, %v647, %v651
        %v656 = vand.u32 2147483647, %v643
        %vm657 = vcmp.eq.f32.partialorder %v656, 8.507059e+37
        %v658 = vand.u32 %v643, 2147483648
        %v659 = vor.u32 1.1754944e-38, %v658
        %v660 = vsel %vm657, %v659, %v655
        %v661 = vmul.f32 1.0, %v660
        %v662 = vrcp.pop %v644
        %v663 = vmul.f32 %v644, %v662
        %v664 = vsub.f32 1.0, %v663
        %v665 = vmul.f32 %v662, %v664
        %v666 = vadd.f32 %v662, %v665
        %vm667 = vweird.f32 %v644
        %vm668 = vweird.f32 %v662
        %vm669 = vmor %vm667, %vm668
        %v670 = vsel %vm669, %v662, %v666
        %v671 = vand.u32 2147483647, %v644
        %vm672 = vcmp.eq.f32.partialorder %v671, 8.507059e+37
        %v673 = vand.u32 %v644, 2147483648
        %v674 = vor.u32 1.1754944e-38, %v673
        %v675 = vsel %vm672, %v674, %v670
        %v676 = vmul.f32 1.0, %v675
        %v677 = vrcp.pop %v645
        %v678 = vmul.f32 %v645, %v677
        %v679 = vsub.f32 1.0, %v678
        %v680 = vmul.f32 %v677, %v679
        %v681 = vadd.f32 %v677, %v680
        %vm682 = vweird.f32 %v645
        %vm683 = vweird.f32 %v677
        %vm684 = vmor %vm682, %vm683
        %v685 = vsel %vm684, %v677, %v681
        %v686 = vand.u32 2147483647, %v645
        %vm687 = vcmp.eq.f32.partialorder %v686, 8.507059e+37
        %v688 = vand.u32 %v645, 2147483648
        %v689 = vor.u32 1.1754944e-38, %v688
        %v690 = vsel %vm687, %v689, %v685
        %v691 = vmul.f32 1.0, %v690
        %v692 = vrcp.pop %v646
        %v693 = vmul.f32 %v646, %v692
        %v694 = vsub.f32 1.0, %v693
        %v695 = vmul.f32 %v692, %v694
        %v696 = vadd.f32 %v692, %v695
        %vm697 = vweird.f32 %v646
        %vm698 = vweird.f32 %v692
        %vm699 = vmor %vm697, %vm698
        %v700 = vsel %vm699, %v692, %v696
        %v701 = vand.u32 2147483647, %v646
        %vm702 = vcmp.eq.f32.partialorder %v701, 8.507059e+37
        %v703 = vand.u32 %v646, 2147483648
        %v704 = vor.u32 1.1754944e-38, %v703
        %v705 = vsel %vm702, %v704, %v700
        %v706 = vmul.f32 1.0, %v705
        %v707 = vmul.f32 %v661, %v480
        %v708 = vmul.f32 %v676, %v481
        %v709 = vmul.f32 %v691, %v482
        %v710 = vmul.f32 %v706, %v483
        %v711 = vmul.f32 %v707, %v579
        %v712 = vmul.f32 %v708, %v582
        %v713 = vmul.f32 %v709, %v585
        %v714 = vmul.f32 %v710, %v588
        %719 = vrot.lane.b32.xlu0 %v707, 64
        %v720 = vpop.permute.xlu0 %719
        %721 = vrot.lane.b32.xlu0 %v708, 64
        %v722 = vpop.permute.xlu0 %721
        %723 = vrot.lane.b32.xlu0 %v709, 64
        %v724 = vpop.permute.xlu0 %723
        %725 = vrot.lane.b32.xlu0 %v710, 64
        %v726 = vpop.permute.xlu0 %725
        %v731 = vsel %vm544, %v711, %v720
        %v732 = vsel %vm544, %v712, %v722
        %v733 = vsel %vm544, %v713, %v724
        %v734 = vsel %vm544, %v714, %v726
        %v735 = vld [vmem:[#allocation3] sm:$0xff]
        %v736 = vld [vmem:[#allocation3 + $0x8] sm:$0xff]
        %737 = vxpose.xlu0.b32.start [1/16] %v464, 128
        %738 = vxpose.xlu0.b32.cont [2/16] %v465, 128
        %739 = vxpose.xlu0.b32.cont [3/16] %v466, 128
        %740 = vxpose.xlu0.b32.cont [4/16] %v467, 128
        %741 = vxpose.xlu0.b32.cont [5/16] 0.0, 128
        %742 = vxpose.xlu0.b32.cont [6/16] 0.0, 128
        %743 = vxpose.xlu0.b32.cont [7/16] 0.0, 128
        %744 = vxpose.xlu0.b32.cont [8/16] 0.0, 128
        %745 = vxpose.xlu0.b32.cont [9/16] 0.0, 128
        %746 = vxpose.xlu0.b32.cont [10/16] 0.0, 128
        %747 = vxpose.xlu0.b32.cont [11/16] 0.0, 128
        %748 = vxpose.xlu0.b32.cont [12/16] 0.0, 128
        %749 = vxpose.xlu0.b32.cont [13/16] 0.0, 128
        %750 = vxpose.xlu0.b32.cont [14/16] 0.0, 128
        %751 = vxpose.xlu0.b32.cont [15/16] 0.0, 128
        %752 = vxpose.xlu0.b32.end [16/16] 0.0, 128
        %v753 = vpop.trf.xlu0
        %v754 = vpop.trf.xlu0
        %v755 = vpop.trf.xlu0
        %v756 = vpop.trf.xlu0
        %v757 = vpop.trf.xlu0
        %v758 = vpop.trf.xlu0
        %v759 = vpop.trf.xlu0
        %v760 = vpop.trf.xlu0
        %v761 = vpop.trf.xlu0
        %v762 = vpop.trf.xlu0
        %v763 = vpop.trf.xlu0
        %v764 = vpop.trf.xlu0
        %v765 = vpop.trf.xlu0
        %v766 = vpop.trf.xlu0
        %v767 = vpop.trf.xlu0
        %v768 = vpop.trf.xlu0
        %v770 = vsel %vm606, %v753, 0
        %v773 = vsel %vm606, %v754, 0
        %775 = vmatpush.msra.mxu0 0.0
        %776 = vmatpush.msra.mxu0 0.0
        %777 = vmatpush.msra.mxu0 0.0
        %778 = vmatpush.msra.mxu0 0.0
        %779 = vmatpush.msra.mxu0 0.0
        %780 = vmatpush.msra.mxu0 0.0
        %781 = vmatpush.msra.mxu0 0.0
        %782 = vmatpush.msra.mxu0 0.0
        %783 = vmatpush.msra.mxu0 0.0
        %784 = vmatpush.msra.mxu0 0.0
        %785 = vmatpush.msra.mxu0 0.0
        %786 = vmatpush.msra.mxu0 0.0
        %787 = vmatpush.msra.mxu0 %v734
        %788 = vmatpush.msra.mxu0 %v733
        %789 = vmatpush.msra.mxu0 %v732
        %790 = vmatpush.msra.mxu0 %v731
        %791 = vmatmul.f32.gmra.mxu0 %v770
        %v792 = vpop.f32.mrf.mxu0
        %v793 = vadd.f32 0.0, %v792
        %794 = vmatmul.f32.gmra.mxu0 %v773
        %v795 = vpop.f32.mrf.mxu0
        %v796 = vadd.f32 0.0, %v795
        %797 = vdwg.mxu0
        %v798 = vadd.f32 %v735, %v793
        %v799 = vadd.f32 %v736, %v796
        %800 = vst [vmem:[#allocation3] sm:$0xff] %v798
        %801 = vst [vmem:[#allocation3 + $0x8] sm:$0xff] %v799
        %p802 = scmp.eq.s32.totalorder %s24, 1
        // Predicated region
        $region65: #{tpu_custom_call.1} parent=51 // pred_check
          %p803 = pneg %p802
        $region66: #{tpu_custom_call.1} parent=51 // pred_check_branch
          %805 = sbr.rel (%p803) target = $region68
        $region67: #{tpu_custom_call.1} parent=51 // pred_region
          %v806 = vld [vmem:[#allocation3] sm:$0xff]
          %v807 = vld [vmem:[#allocation3 + $0x8] sm:$0xff]
          %v808 = vadd.f32 %v806, 1e-06
          %v809 = vadd.f32 %v807, 1e-06
          %v810 = vrcp.pop %v808
          %v811 = vmul.f32 %v808, %v810
          %v812 = vsub.f32 1.0, %v811
          %v813 = vmul.f32 %v810, %v812
          %v814 = vadd.f32 %v810, %v813
          %vm815 = vweird.f32 %v808
          %vm816 = vweird.f32 %v810
          %vm817 = vmor %vm815, %vm816
          %v818 = vsel %vm817, %v810, %v814
          %v819 = vand.u32 2147483647, %v808
          %vm820 = vcmp.eq.f32.partialorder %v819, 8.507059e+37
          %v821 = vand.u32 %v808, 2147483648
          %v822 = vor.u32 1.1754944e-38, %v821
          %v823 = vsel %vm820, %v822, %v818
          %v824 = vrcp.pop %v809
          %v825 = vmul.f32 %v809, %v824
          %v826 = vsub.f32 1.0, %v825
          %v827 = vmul.f32 %v824, %v826
          %v828 = vadd.f32 %v824, %v827
          %vm829 = vweird.f32 %v809
          %vm830 = vweird.f32 %v824
          %vm831 = vmor %vm829, %vm830
          %v832 = vsel %vm831, %v824, %v828
          %v833 = vand.u32 2147483647, %v809
          %vm834 = vcmp.eq.f32.partialorder %v833, 8.507059e+37
          %v835 = vand.u32 %v809, 2147483648
          %v836 = vor.u32 1.1754944e-38, %v835
          %v837 = vsel %vm834, %v836, %v832
          %840 = vrot.lane.b32.xlu0 %v823, 64
          %v841 = vpop.permute.xlu0 %840
          %842 = vrot.lane.b32.xlu0 %v837, 64
          %v843 = vpop.permute.xlu0 %842
          %v846 = vmul.f32 %v806, %v841
          %v847 = vmul.f32 %v807, %v843
          %850 = vrot.lane.b32.xlu0 %v846, 96
          %v851 = vpop.permute.xlu0 %850
          %852 = vrot.lane.b32.xlu0 %v847, 96
          %v853 = vpop.permute.xlu0 %852
          %v856 = vadd.f32 %v846, %v851
          %v857 = vadd.f32 %v847, %v853
          %v858 = vmul.f32 %v856, 0.5
          %v859 = vmul.f32 %v857, 0.5
          %v860 = vadd.f32 %v456, %v858
          %v861 = vadd.f32 %v458, %v859
          %v862 = vsel %vm606, %v860, 0.0
          %v863 = vsel %vm606, %v861, 0.0
          %v864 = vadd.f32 %v862, %v863
          %v865 = vrot.slane %v864, 4
          %v866 = vadd.f32 %v864, %v865
          %v867 = vrot.slane %v866, 2
          %v868 = vadd.f32 %v866, %v867
          %v869 = vrot.slane %v868, 1
          %v870 = vadd.f32 %v868, %v869
          %v871 = vmul.f32 %v870, 0.0625
          %v872 = vmul.f32 %v860, %v860
          %v873 = vmul.f32 %v861, %v861
          %v874 = vsel %vm606, %v872, 0.0
          %v875 = vsel %vm606, %v873, 0.0
          %v876 = vadd.f32 %v874, %v875
          %v877 = vrot.slane %v876, 4
          %v878 = vadd.f32 %v876, %v877
          %v879 = vrot.slane %v878, 2
          %v880 = vadd.f32 %v878, %v879
          %v881 = vrot.slane %v880, 1
          %v882 = vadd.f32 %v880, %v881
          %v883 = vmul.f32 %v882, 0.0625
          %v884 = vmul.f32 %v871, %v871
          %v885 = vsub.f32 %v883, %v884
          %v886 = vsub.f32 %v860, %v871
          %v887 = vsub.f32 %v861, %v871
          %v888 = vadd.f32 %v885, 1e-05
          %v889 = vrsqrt.pop %v888
          %v890 = vmul.f32 %v889, %v888
          %v891 = vmul.f32 %v890, %v889
          %v892 = vmul.f32 0.5, %v891
          %v893 = vsub.f32 1.5, %v892
          %v894 = vmul.f32 %v889, %v893
          %vm895 = vweird.f32 %v888
          %vm896 = vweird.f32 %v889
          %vm897 = vmor %vm895, %vm896
          %v898 = vsel %vm897, %v889, %v894
          %v899 = vmul.f32 %v886, %v898
          %v900 = vmul.f32 %v887, %v898
          %v901 = vld [vmem:[%s6] sm:$0x1]
          %v903 = vperm.slane %v901, 0
          %v905 = vmul.f32 %v899, %v903
          %v906 = vmul.f32 %v900, %v903
          %v907 = vld [vmem:[%s7] sm:$0x1]
          %v909 = vperm.slane %v907, 0
          %v911 = vadd.f32 %v905, %v909
          %v912 = vadd.f32 %v906, %v909
          %v913 = vmax.f32 %v911, 0.0
          %v914 = vmax.f32 %v912, 0.0
          %915 = vst.msk [vmem:[#allocation9] sm:$0xff] %vm606, %v913
          %916 = vst.msk [vmem:[#allocation9 + $0x8] sm:$0xff] %vm606, %v914
        $region68: #{tpu_custom_call.1} parent=51 // pred_fallthru
          _
        // Predicated region
        $region69: #{tpu_custom_call.1} parent=51 // pred_check
          %p917 = pneg %p220
        $region70: #{tpu_custom_call.1} parent=51 // pred_check_branch
          %919 = sbr.rel (%p917) target = $region72
        $region71: #{tpu_custom_call.1} parent=51 // pred_region
          %921 = vsyncadd [#allocation6], 0
          %s922 = sshll.u32 [#allocation9], 4
          %s923 = int_to_ptr.vmem [resolvable:$true] %s922
          %s924 = sshll.u32 %s8, 4
          %s925 = int_to_ptr.hbm [resolvable:$true] %s924
          %930 = dma.vmem_to_hbm [thread:$0]  %s923, 256, %s925, [#allocation6], 128, 128, 8
        $region72: #{tpu_custom_call.1} parent=51 // pred_fallthru
          _
        // Predicated region
        $region73: #{tpu_custom_call.1} parent=51 // pred_check
          %p931 = pneg %p220
        $region74: #{tpu_custom_call.1} parent=51 // pred_check_branch
          %933 = sbr.rel (%p931) target = $region76
        $region75: #{tpu_custom_call.1} parent=51 // pred_region
          %935 = dma.done [#allocation6], 256
        $region76: #{tpu_custom_call.1} parent=51 // pred_fallthru
          _
      $region52: #{tpu_custom_call.1} parent=5 // pred_fallthru
        _
      %p936 = scmp.le.s32.totalorder 2, %s19
      // Predicated region
      $region77: #{tpu_custom_call.1} parent=5 // pred_check
        %p937 = pneg %p936
      $region78: #{tpu_custom_call.1} parent=5 // pred_check_branch
        %939 = sbr.rel (%p937) target = $region80
      $region79: #{tpu_custom_call.1} parent=5 // pred_region
        %s940 = ssub.s32 %s19, 2
      $region80: #{tpu_custom_call.1} parent=5 // pred_fallthru
        _
    $region6: #{tpu_custom_call.1} parent=1 // loop_footer
      %s23 = sadd.s32 1, %s19
    $region7: #{tpu_custom_call.1} parent=1 // loop_footer_branch
      %18 = sbr.rel target = $region3
    $region8: #{tpu_custom_call.1} parent=1 // loop_exit
      _
    %941 = vsyncpa [#allocation5], 1
    %s942 = scalar_lea.sflag [#allocation5], 1
    %943 = vsyncpa %s942, 1
    %944 = vsyncpa [#allocation8], 1
    %s945 = scalar_lea.sflag [#allocation8], 1
    %946 = vsyncpa %s945, 1
    %947 = vsyncpa [#allocation6], 1
    %s948 = scalar_lea.sflag [#allocation6], 1
    %949 = vsyncpa %s948, 1

</llo_original>
